<compile_context>
chip_gen: v7x
topology: tpu7x:2x2x1
jax: 0.10.0
libtpu: 0.0.40
codegen_flags: <defaults>
</compile_context>

<pallas_src>
import jax
import jax.numpy as jnp
from jax import lax
from jax.experimental import pallas as pl
from jax.experimental.pallas import tpu as pltpu

_LANES = 128
_CHUNK_ROWS = 256   # in-kernel accumulation chunk; bounds live vregs / spills


def _round_up(x, m):
    return -(-x // m) * m


def _tpu_defaults():
    """(block_rows, num_splits) chosen from the local TPU generation."""
    try:
        kind = jax.devices()[0].device_kind.lower()
    except Exception:
        kind = ""
    if ("v5e" in kind) or ("v5 lite" in kind) or ("v5lite" in kind):
        block_rows = 4096   # 3 inputs x 2 bufs x 2 MiB = 12 MiB < 16 MiB scoped VMEM
    elif ("v6" in kind) or ("v7" in kind) or ("7x" in kind):
        block_rows = 8192   # 3 inputs x 2 bufs x 4 MiB = 24 MiB < 32 MiB scoped VMEM
    else:
        block_rows = 4096
    two_tc = ("v7" in kind) or ("7x" in kind) or ("v4" in kind) or ("v5p" in kind)
    return block_rows, (2 if two_tc else 1)


def _make_masked_loss_kernel(mode, *, block_rows, chunk_rows, blocks_per_split,
                             num_full_blocks, rows, needs_mask):
    """Accumulate sum(criteria(pred*m, target*m)) and sum(m) per split."""
    assert block_rows % chunk_rows == 0
    num_chunks = block_rows // chunk_rows

    def kernel(p_ref, t_ref, m_ref, out_ref, acc_loss_ref, acc_mask_ref):
        c = pl.program_id(0)   # split ("parallel"; one per TensorCore where available)
        i = pl.program_id(1)   # row block within the split ("arbitrary")

        @pl.when(i == 0)
        def _init():
            acc_loss_ref[...] = jnp.zeros_like(acc_loss_ref)
            acc_mask_ref[...] = jnp.zeros_like(acc_mask_ref)

        def load_chunk(j):
            start = j * chunk_rows
            if not isinstance(start, int):
                start = pl.multiple_of(start, chunk_rows)
            p = p_ref[pl.ds(start, chunk_rows), :].astype(jnp.float32)
            t = t_ref[pl.ds(start, chunk_rows), :].astype(jnp.float32)
            m = m_ref[pl.ds(start, chunk_rows), :].astype(jnp.float32)
            return p, t, m

        def accumulate(contrib, m):
            # (chunk_rows,128) -> (chunk_rows//8, 8, 128) is a layout no-op; the
            # axis-0 sum is plain VPU adds into the resident (8,128) accumulators.
            acc_loss_ref[...] += contrib.reshape(-1, 8, _LANES).sum(axis=0)
            acc_mask_ref[...] += m.reshape(-1, 8, _LANES).sum(axis=0)

        def full_chunk(j):
            p, t, m = load_chunk(j)
            d = (p - t) * m                               # one vmul saved vs p*m - t*m
            contrib = jnp.abs(d) if mode == "L1" else d * d
            accumulate(contrib, m)

        def run_chunks(body):
            if num_chunks == 1:
                body(0)
            else:
                def loop_body(j, carry):
                    body(j)
                    return carry
                lax.fori_loop(0, num_chunks, loop_body, 0)

        if needs_mask:
            gb = c * blocks_per_split + i                 # global row-block index

            def tail_chunk(j):
                p, t, m = load_chunk(j)
                row = lax.broadcasted_iota(jnp.int32, (chunk_rows, _LANES), 0)
                valid = (gb * block_rows + j * chunk_rows + row) < rows
                m = jnp.where(valid, m, 0.0)
                d = (p - t) * m
                contrib = jnp.abs(d) if mode == "L1" else d * d
                # Rows past the array hold unspecified VMEM (possibly NaN/Inf and
                # NaN * 0 == NaN), so zero the contribution explicitly too.
                contrib = jnp.where(valid, contrib, 0.0)
                accumulate(contrib, m)

            @pl.when(gb < num_full_blocks)                # fast path: no mask work
            def _full():
                run_chunks(full_chunk)

            @pl.when(gb >= num_full_blocks)               # only ragged tail block(s)
            def _tail():
                run_chunks(tail_chunk)
        else:
            run_chunks(full_chunk)

        @pl.when(i == pl.num_programs(1) - 1)
        def _finalize():
            # Single cross-lane/sublane reduce per split, written to SMEM partials.
            out_ref[0, 0] = jnp.sum(acc_loss_ref[...])
            out_ref[0, 1] = jnp.sum(acc_mask_ref[...])

    return kernel


def masked_loss(pred, target, mask, mode="L1", block_rows=None, num_splits=None):
    """Pallas implementation of MaskedLoss.forward."""
    if mode not in ("L1", "L2"):
        raise Exception(f"Not support mode: {mode}")
    if not (pred.shape == target.shape == mask.shape):
        raise Exception(
            f"Inconsistent dimensions: {pred.shape}; {target.shape}; {mask.shape}")

    default_block_rows, default_splits = _tpu_defaults()
    if block_rows is None:
        block_rows = default_block_rows
    if num_splits is None:
        num_splits = default_splits

    total = int(pred.size)
    rem = total % _LANES
    rows = total // _LANES + (1 if rem else 0)

    # Lane-dense (rows, 128) view.  Reshape is a bitcast (no HBM copy); a pad copy
    # only happens when total % 128 != 0.  No sublane round-up pad: ragged rows are
    # handled by the in-kernel row mask on the tail block only.
    def prep(x):
        if rem:
            x = jnp.pad(x.reshape(-1), (0, _LANES - rem))
        return x.reshape(rows, _LANES)

    p2, t2, m2 = prep(pred), prep(target), prep(mask)

    # Row-block sizing: multiple of 8 sublanes, and of the in-kernel chunk when
    # larger than one chunk; never bigger than the (8-rounded) row count.
    rows_ceil8 = _round_up(rows, 8)
    block_rows = max(8, min(int(block_rows), rows_ceil8))
    if block_rows >= _CHUNK_ROWS:
        block_rows = (block_rows // _CHUNK_ROWS) * _CHUNK_ROWS
        chunk_rows = _CHUNK_ROWS
    else:
        block_rows = _round_up(block_rows, 8)
        chunk_rows = block_rows

    num_blocks = pl.cdiv(rows, block_rows)
    num_splits = max(1, min(int(num_splits), num_blocks))
    blocks_per_split = pl.cdiv(num_blocks, num_splits)
    padded_blocks = num_splits * blocks_per_split
    num_full_blocks = rows // block_rows
    needs_mask = num_full_blocks < padded_blocks          # any ragged / padding block
    clamp = padded_blocks != num_blocks                    # split padding present

    def in_index_map(split, blk):
        gb = split * blocks_per_split + blk
        if clamp:
            gb = jnp.minimum(gb, num_blocks - 1)           # padding blocks re-read the
        return (gb, 0)                                      # last block, fully masked

    in_spec = pl.BlockSpec((block_rows, _LANES), in_index_map)

    cost = pl.CostEstimate(
        flops=5 * total,
        transcendentals=0,
        bytes_accessed=sum(int(x.size) * x.dtype.itemsize
                           for x in (pred, target, mask)) + num_splits * 2 * 4,
    )

    partials = pl.pallas_call(
        _make_masked_loss_kernel(mode, block_rows=block_rows, chunk_rows=chunk_rows,
                                 blocks_per_split=blocks_per_split,
                                 num_full_blocks=num_full_blocks, rows=rows,
                                 needs_mask=needs_mask),
        out_shape=jax.ShapeDtypeStruct((num_splits, 2), jnp.float32),
        grid_spec=pltpu.PrefetchScalarGridSpec(
            num_scalar_prefetch=0,
            grid=(num_splits, blocks_per_split),
            in_specs=[in_spec, in_spec, in_spec],
            out_specs=pl.BlockSpec((1, 2), lambda split, blk: (split, 0),
                                   memory_space=pltpu.MemorySpace.SMEM),
            scratch_shapes=[pltpu.VMEM((8, _LANES), jnp.float32),
                            pltpu.VMEM((8, _LANES), jnp.float32)],
        ),
        compiler_params=pltpu.CompilerParams(
            dimension_semantics=("parallel", "arbitrary")),
        cost_estimate=cost,
    )(p2, t2, m2)

    loss_sum = jnp.sum(partials[:, 0])
    mask_sum = jnp.sum(partials[:, 1])
    # loss_sum / clamp(mask_sum, min=1e-6)
    return loss_sum / jnp.maximum(mask_sum, 1e-6)


def _reference_masked_loss(pred, target, mask, mode="L1"):
    """Pure-JAX reference mirroring the PyTorch module."""
    d = pred * mask - target * mask
    s = jnp.sum(jnp.abs(d)) if mode == "L1" else jnp.sum(d * d)
    return s / jnp.maximum(jnp.sum(mask), 1e-6)


if __name__ == "__main__":
    key = jax.random.PRNGKey(0)
    k1, k2, k3 = jax.random.split(key, 3)

    # Shapes consistent with the module's forward (image-like NCHW tensors).
    N, C, H, W = 2, 4, 16, 16
    pred = jax.random.normal(k1, (N, C, H, W), dtype=jnp.float32)
    target = jax.random.normal(k2, (N, C, H, W), dtype=jnp.float32)
    mask = (jax.random.uniform(k3, (N, C, H, W)) > 0.3).astype(jnp.float32)

    for mode in ("L1", "L2"):
        out = jax.block_until_ready(masked_loss(pred, target, mask, mode=mode))
        ref = jax.block_until_ready(_reference_masked_loss(pred, target, mask, mode=mode))
        assert jnp.allclose(out, ref, rtol=1e-4, atol=1e-5), (mode, out, ref)

    # Multi-block grid + partial last block (gated row-mask tail path).
    k4, k5, k6 = jax.random.split(jax.random.PRNGKey(1), 3)
    shp = (2, 4, 24, 16)   # 3072 elems -> rows=24; block_rows=16 -> 2 blocks, last partial
    p3 = jax.random.normal(k4, shp, dtype=jnp.float32)
    t3 = jax.random.normal(k5, shp, dtype=jnp.float32)
    m3 = (jax.random.uniform(k6, shp) > 0.3).astype(jnp.float32)
    out3 = jax.block_until_ready(masked_loss(p3, t3, m3, mode="L1", block_rows=16))
    ref3 = jax.block_until_ready(_reference_masked_loss(p3, t3, m3, mode="L1"))
    assert jnp.allclose(out3, ref3, rtol=1e-4, atol=1e-5), (out3, ref3)

    # Explicit 2-split (multi-TensorCore) structure with split padding blocks.
    out3b = jax.block_until_ready(
        masked_loss(p3, t3, m3, mode="L2", block_rows=8, num_splits=2))
    ref3b = jax.block_until_ready(_reference_masked_loss(p3, t3, m3, mode="L2"))
    assert jnp.allclose(out3b, ref3b, rtol=1e-4, atol=1e-5), (out3b, ref3b)

    # Lane-tail pad path (total % 128 != 0) + partial single block.
    k7, k8, k9 = jax.random.split(jax.random.PRNGKey(2), 3)
    shp2 = (2, 3, 10, 13)  # 780 elems -> rows=7 after lane pad
    p4 = jax.random.normal(k7, shp2, dtype=jnp.float32)
    t4 = jax.random.normal(k8, shp2, dtype=jnp.float32)
    m4 = (jax.random.uniform(k9, shp2) > 0.5).astype(jnp.float32)
    out4 = jax.block_until_ready(masked_loss(p4, t4, m4, mode="L2"))
    ref4 = jax.block_until_ready(_reference_masked_loss(p4, t4, m4, mode="L2"))
    assert jnp.allclose(out4, ref4, rtol=1e-4, atol=1e-5), (out4, ref4)

    print("KERNEL_OK")
</pallas_src>

<mosaic_0001>
module attributes {stable_mosaic.version = 11 : i64} {
  func.func @kernel(%arg0: i32, %arg1: i32, %arg2: memref<16x128xf32, #tpu.memory_space<vmem>>, %arg3: memref<16x128xf32, #tpu.memory_space<vmem>>, %arg4: memref<16x128xf32, #tpu.memory_space<vmem>>, %arg5: memref<1x2xf32, #tpu.memory_space<smem>>, %arg6: memref<8x128xf32, #tpu.memory_space<vmem>>, %arg7: memref<8x128xf32, #tpu.memory_space<vmem>>) attributes {dimension_semantics = [#tpu.dimension_semantics<parallel>, #tpu.dimension_semantics<arbitrary>], iteration_bounds = array<i64: 1, 1>, scalar_prefetch = 0 : i64, scratch_operands = 2 : i64, tpu.core_type = #tpu.core_type<tc>, window_params = [{transform_indices = @transform_0, window_bounds = array<i64: 16, 128>}, {transform_indices = @transform_1, window_bounds = array<i64: 16, 128>}, {transform_indices = @transform_2, window_bounds = array<i64: 16, 128>}, {transform_indices = @transform_3, window_bounds = array<i64: 1, 2>}]} {
    %c0_i32 = arith.constant 0 : i32
    %0 = arith.cmpi eq, %arg1, %c0_i32 : i32
    %1 = arith.extui %0 : i1 to i32
    %c0_i32_0 = arith.constant 0 : i32
    %2 = arith.cmpi ne, %1, %c0_i32_0 : i32
    scf.if %2 {
      %cst_17 = arith.constant 0.000000e+00 : f32
      %22 = vector.broadcast %cst_17 : f32 to vector<8x128xf32>
      %c0_18 = arith.constant 0 : index
      %c0_19 = arith.constant 0 : index
      %23 = vector.load %arg6[%c0_18, %c0_19] : memref<8x128xf32, #tpu.memory_space<vmem>>, vector<8x128xf32>
      tpu.vector_store %arg6[%c0_18, %c0_19], %22 {strides = array<i32>} : memref<8x128xf32, #tpu.memory_space<vmem>>, vector<8x128xf32>,
      %cst_20 = arith.constant 0.000000e+00 : f32
      %24 = vector.broadcast %cst_20 : f32 to vector<8x128xf32>
      %c0_21 = arith.constant 0 : index
      %c0_22 = arith.constant 0 : index
      %25 = vector.load %arg7[%c0_21, %c0_22] : memref<8x128xf32, #tpu.memory_space<vmem>>, vector<8x128xf32>
      tpu.vector_store %arg7[%c0_21, %c0_22], %24 {strides = array<i32>} : memref<8x128xf32, #tpu.memory_space<vmem>>, vector<8x128xf32>,
    } else {
    }
    %c0 = arith.constant 0 : index
    %c0_1 = arith.constant 0 : index
    %3 = vector.load %arg2[%c0, %c0_1] : memref<16x128xf32, #tpu.memory_space<vmem>>, vector<16x128xf32>
    %c0_2 = arith.constant 0 : index
    %c0_3 = arith.constant 0 : index
    %4 = vector.load %arg3[%c0_2, %c0_3] : memref<16x128xf32, #tpu.memory_space<vmem>>, vector<16x128xf32>
    %c0_4 = arith.constant 0 : index
    %c0_5 = arith.constant 0 : index
    %5 = vector.load %arg4[%c0_4, %c0_5] : memref<16x128xf32, #tpu.memory_space<vmem>>, vector<16x128xf32>
    %6 = arith.subf %3, %4 : vector<16x128xf32>
    %7 = arith.mulf %6, %5 : vector<16x128xf32>
    %8 = math.absf %7 : vector<16x128xf32>
    %c0_6 = arith.constant 0 : index
    %c0_7 = arith.constant 0 : index
    %9 = vector.load %arg6[%c0_6, %c0_7] : memref<8x128xf32, #tpu.memory_space<vmem>>, vector<8x128xf32>
    %10 = vector.shape_cast %8 : vector<16x128xf32> to vector<2x8x128xf32>
    %cst = arith.constant dense<0.000000e+00> : vector<8x128xf32>
    %11 = vector.multi_reduction <add>, %10, %cst [0] : vector<2x8x128xf32> to vector<8x128xf32>
    %12 = arith.addf %9, %11 : vector<8x128xf32>
    %c0_8 = arith.constant 0 : index
    %c0_9 = arith.constant 0 : index
    %13 = vector.load %arg6[%c0_8, %c0_9] : memref<8x128xf32, #tpu.memory_space<vmem>>, vector<8x128xf32>
    tpu.vector_store %arg6[%c0_8, %c0_9], %12 {strides = array<i32>} : memref<8x128xf32, #tpu.memory_space<vmem>>, vector<8x128xf32>,
    %c0_10 = arith.constant 0 : index
    %c0_11 = arith.constant 0 : index
    %14 = vector.load %arg7[%c0_10, %c0_11] : memref<8x128xf32, #tpu.memory_space<vmem>>, vector<8x128xf32>
    %15 = vector.shape_cast %5 : vector<16x128xf32> to vector<2x8x128xf32>
    %cst_12 = arith.constant dense<0.000000e+00> : vector<8x128xf32>
    %16 = vector.multi_reduction <add>, %15, %cst_12 [0] : vector<2x8x128xf32> to vector<8x128xf32>
    %17 = arith.addf %14, %16 : vector<8x128xf32>
    %c0_13 = arith.constant 0 : index
    %c0_14 = arith.constant 0 : index
    %18 = vector.load %arg7[%c0_13, %c0_14] : memref<8x128xf32, #tpu.memory_space<vmem>>, vector<8x128xf32>
    tpu.vector_store %arg7[%c0_13, %c0_14], %17 {strides = array<i32>} : memref<8x128xf32, #tpu.memory_space<vmem>>, vector<8x128xf32>,
    %c0_i32_15 = arith.constant 0 : i32
    %19 = arith.cmpi eq, %arg1, %c0_i32_15 : i32
    %20 = arith.extui %19 : i1 to i32
    %c0_i32_16 = arith.constant 0 : i32
    %21 = arith.cmpi ne, %20, %c0_i32_16 : i32
    scf.if %21 {
      %c0_17 = arith.constant 0 : index
      %c0_18 = arith.constant 0 : index
      %22 = vector.load %arg6[%c0_17, %c0_18] : memref<8x128xf32, #tpu.memory_space<vmem>>, vector<8x128xf32>
      %23 = vector.shape_cast %22 : vector<8x128xf32> to vector<1x8x128xf32>
      %cst_19 = arith.constant dense<0.000000e+00> : vector<1xf32>
      %24 = vector.multi_reduction <add>, %23, %cst_19 [1, 2] : vector<1x8x128xf32> to vector<1xf32>
      %25 = vector.shape_cast %24 : vector<1xf32> to vector<1x1x1xf32>
      %26 = vector.extract %25[0, 0, 0] : f32 from vector<1x1x1xf32>
      %c0_20 = arith.constant 0 : index
      %c0_21 = arith.constant 0 : index
      %27 = memref.load %arg5[%c0_20, %c0_21] : memref<1x2xf32, #tpu.memory_space<smem>>
      memref.store %26, %arg5[%c0_20, %c0_21] : memref<1x2xf32, #tpu.memory_space<smem>>
      %c0_22 = arith.constant 0 : index
      %c0_23 = arith.constant 0 : index
      %28 = vector.load %arg7[%c0_22, %c0_23] : memref<8x128xf32, #tpu.memory_space<vmem>>, vector<8x128xf32>
      %29 = vector.shape_cast %28 : vector<8x128xf32> to vector<1x8x128xf32>
      %cst_24 = arith.constant dense<0.000000e+00> : vector<1xf32>
      %30 = vector.multi_reduction <add>, %29, %cst_24 [1, 2] : vector<1x8x128xf32> to vector<1xf32>
      %31 = vector.shape_cast %30 : vector<1xf32> to vector<1x1x1xf32>
      %32 = vector.extract %31[0, 0, 0] : f32 from vector<1x1x1xf32>
      %c0_25 = arith.constant 0 : index
      %c1 = arith.constant 1 : index
      %33 = memref.load %arg5[%c0_25, %c1] : memref<1x2xf32, #tpu.memory_space<smem>>
      memref.store %32, %arg5[%c0_25, %c1] : memref<1x2xf32, #tpu.memory_space<smem>>
    } else {
    }
    return
  }
  func.func @transform_0(%arg0: i32, %arg1: i32) -> (i32, i32) {
    %c1_i32 = arith.constant 1 : i32
    %0 = arith.muli %arg0, %c1_i32 : i32
    %1 = arith.addi %0, %arg1 : i32
    %c0_i32 = arith.constant 0 : i32
    %c0_i32_0 = arith.constant 0 : i32
    return %1, %c0_i32 : i32, i32
  }
  func.func @transform_1(%arg0: i32, %arg1: i32) -> (i32, i32) {
    %c1_i32 = arith.constant 1 : i32
    %0 = arith.muli %arg0, %c1_i32 : i32
    %1 = arith.addi %0, %arg1 : i32
    %c0_i32 = arith.constant 0 : i32
    %c0_i32_0 = arith.constant 0 : i32
    return %1, %c0_i32 : i32, i32
  }
  func.func @transform_2(%arg0: i32, %arg1: i32) -> (i32, i32) {
    %c1_i32 = arith.constant 1 : i32
    %0 = arith.muli %arg0, %c1_i32 : i32
    %1 = arith.addi %0, %arg1 : i32
    %c0_i32 = arith.constant 0 : i32
    %c0_i32_0 = arith.constant 0 : i32
    return %1, %c0_i32 : i32, i32
  }
  func.func @transform_3(%arg0: i32, %arg1: i32) -> (i32, i32) {
    %c0_i32 = arith.constant 0 : i32
    %c0_i32_0 = arith.constant 0 : i32
    return %arg0, %c0_i32 : i32, i32
  }
}

</mosaic_0001>

<llo_original>
// kernel: tpu_custom_call.1
$region0: #{tpu_custom_call.1}
  #allocation0 [shape = 'u32[]', space=smem, size = 0x4, offset = 0x4, fixed_abs, tag = 'smem constant byte address 0x4 - core index']
  #allocation1 [shape = 'u32[144,128]{1,0:T(1,128)}', space=vmem, size = 0x12000, scoped, tag = 'internal scratch']
  #allocation2 [shape = 'f32[8,128]{1,0:T(8,128)}', space=vmem, size = 0x1000, scoped, tag = 'scratch operand']
  #allocation3 [shape = 'f32[8,128]{1,0:T(8,128)}', space=vmem, size = 0x1000, scoped, tag = 'scratch operand']
  %s0 = inlined_call_operand.hbm [shape: f32[16,128], index: 0, kind: input, shape index: {}]
  %s1 = inlined_call_operand.hbm [shape: f32[16,128], index: 1, kind: input, shape index: {}]
  %s2 = inlined_call_operand.hbm [shape: f32[16,128], index: 2, kind: input, shape index: {}]
  %s3 = inlined_call_operand.hbm [shape: f32[1,2], index: 3, kind: output, shape index: {}]
  %s4 = sld [smem:[#allocation0]]
  $region42: #{tpu_custom_call.1} parent=0
    _
  %s6 = ssub.s32 1, %s4
  %s7 = scalar_select 0, %s6, %s4
  $region1: #{tpu_custom_call.1} parent=0
    #allocation4 [shape = 'u8[8192]{0}', space=vmem, size = 0x2000, scoped, tag = 'input window, operand 0, single buffered']
    #allocation5 [shape = 's32[1]{0}', space=sflag, size = 0x4, scoped, tag = 'scoped memory for tpu_custom_call.1']
    #allocation6 [shape = 's32[1]{0}', space=sflag, size = 0x4, scoped, tag = 'scoped memory for tpu_custom_call.1']
    #allocation7 [shape = 'u8[8192]{0}', space=vmem, size = 0x2000, scoped, tag = 'input window, operand 1, single buffered']
    #allocation8 [shape = 's32[1]{0}', space=sflag, size = 0x4, scoped, tag = 'scoped memory for tpu_custom_call.1']
    #allocation9 [shape = 'u8[8192]{0}', space=vmem, size = 0x2000, scoped, tag = 'input window, operand 2, single buffered']
    #allocation10 [shape = 'u8[512]{0}', space=smem, size = 0x200, scoped, tag = 'output window, operand 0, single buffered']
    %8 = vsyncpa [#allocation5], 0
    %9 = vsyncpa [#allocation8], 0
    %10 = vsyncpa [#allocation6], 0
    // Predicated region
    $region2: #{tpu_custom_call.1} parent=1 // pred_check
      _
    $region3: #{tpu_custom_call.1} parent=1 // pred_check_branch
      %12 = sbr.rel (0) target = $region5
    $region4: #{tpu_custom_call.1} parent=1 // pred_region
      %s13 = sadd.s32 0, 0
      %s14 = smul.u32 2, %s13
      %s16 = ssub.s32 256, 256
      %17 = vsyncadd [#allocation5], %s16
      %s18 = smul.addr %s14, 128
      %s19 = scalar_lea.hbm %s0, %s18
      %s20 = sshll.u32 [#allocation4], 4
      %s21 = int_to_ptr.vmem [resolvable:$true] %s20
      %26 = dma.hbm_to_vmem [thread:$0]  %s19, 256, %s21, [#allocation5], 128, 128, 8
    $region5: #{tpu_custom_call.1} parent=1 // pred_fallthru
      _
    // Predicated region
    $region6: #{tpu_custom_call.1} parent=1 // pred_check
      _
    $region7: #{tpu_custom_call.1} parent=1 // pred_check_branch
      %28 = sbr.rel (0) target = $region9
    $region8: #{tpu_custom_call.1} parent=1 // pred_region
      %s29 = sadd.s32 0, 0
      %s30 = smul.u32 2, %s29
      %s32 = ssub.s32 256, 256
      %33 = vsyncadd [#allocation8], %s32
      %s34 = smul.addr %s30, 128
      %s35 = scalar_lea.hbm %s1, %s34
      %s36 = sshll.u32 [#allocation7], 4
      %s37 = int_to_ptr.vmem [resolvable:$true] %s36
      %42 = dma.hbm_to_vmem [thread:$0]  %s35, 256, %s37, [#allocation8], 128, 128, 8
    $region9: #{tpu_custom_call.1} parent=1 // pred_fallthru
      _
    // Predicated region
    $region10: #{tpu_custom_call.1} parent=1 // pred_check
      _
    $region11: #{tpu_custom_call.1} parent=1 // pred_check_branch
      %44 = sbr.rel (0) target = $region13
    $region12: #{tpu_custom_call.1} parent=1 // pred_region
      %s45 = sadd.s32 0, 0
      %s46 = smul.u32 2, %s45
      %s48 = ssub.s32 256, 256
      %49 = vsyncadd [#allocation8], %s48
      %s50 = smul.addr %s46, 128
      %s51 = scalar_lea.hbm %s2, %s50
      %s52 = sshll.u32 [#allocation9], 4
      %s53 = int_to_ptr.vmem [resolvable:$true] %s52
      %58 = dma.hbm_to_vmem [thread:$0]  %s51, 256, %s53, [#allocation8], 128, 128, 8
    $region13: #{tpu_custom_call.1} parent=1 // pred_fallthru
      _
    // Predicated region
    $region14: #{tpu_custom_call.1} parent=1 // pred_check
      _
    $region15: #{tpu_custom_call.1} parent=1 // pred_check_branch
      %60 = sbr.rel (0) target = $region17
    $region16: #{tpu_custom_call.1} parent=1 // pred_region
      %61 = dma.done [#allocation5], 256
    $region17: #{tpu_custom_call.1} parent=1 // pred_fallthru
      _
    // Predicated region
    $region18: #{tpu_custom_call.1} parent=1 // pred_check
      _
    $region19: #{tpu_custom_call.1} parent=1 // pred_check_branch
      %63 = sbr.rel (0) target = $region21
    $region20: #{tpu_custom_call.1} parent=1 // pred_region
      %64 = dma.done [#allocation8], 256
    $region21: #{tpu_custom_call.1} parent=1 // pred_fallthru
      _
    // Predicated region
    $region22: #{tpu_custom_call.1} parent=1 // pred_check
      _
    $region23: #{tpu_custom_call.1} parent=1 // pred_check_branch
      %66 = sbr.rel (0) target = $region25
    $region24: #{tpu_custom_call.1} parent=1 // pred_region
      %67 = dma.done [#allocation8], 256
    $region25: #{tpu_custom_call.1} parent=1 // pred_fallthru
      _
    %s68 = sadd.s32 0, 0
    %s69 = smul.u32 2, %s68
    %s70 = sadd.s32 0, 0
    %s71 = smul.u32 2, %s70
    %s72 = sadd.s32 0, 0
    %s73 = smul.u32 2, %s72
    %p74 = scmp.eq.s32.totalorder 0, 0
    // Predicated region
    $region26: #{tpu_custom_call.1} parent=1 // pred_check
      %p75 = pneg %p74
    $region27: #{tpu_custom_call.1} parent=1 // pred_check_branch
      %77 = sbr.rel (%p75) target = $region29
    $region28: #{tpu_custom_call.1} parent=1 // pred_region
      %78 = vst [vmem:[#allocation2] sm:$0xff] 0.0
      %79 = vst [vmem:[#allocation3] sm:$0xff] 0.0
    $region29: #{tpu_custom_call.1} parent=1 // pred_fallthru
      _
    %v80 = vld [vmem:[#allocation4] sm:$0xff]
    %v81 = vld [vmem:[#allocation4 + $0x8] sm:$0xff]
    %v82 = vld [vmem:[#allocation7] sm:$0xff]
    %v83 = vld [vmem:[#allocation7 + $0x8] sm:$0xff]
    %v84 = vld [vmem:[#allocation9] sm:$0xff]
    %v85 = vld [vmem:[#allocation9 + $0x8] sm:$0xff]
    %v86 = vsub.f32 %v80, %v82
    %v87 = vsub.f32 %v81, %v83
    %v88 = vmul.f32 %v86, %v84
    %v89 = vmul.f32 %v87, %v85
    %v90 = vand.u32 2147483647, %v88
    %v91 = vand.u32 2147483647, %v89
    %v92 = vld [vmem:[#allocation2] sm:$0xff]
    %v93 = vadd.f32 %v90, %v91
    %v94 = vadd.f32 %v92, %v93
    %95 = vst [vmem:[#allocation2] sm:$0xff] %v94
    %v96 = vld [vmem:[#allocation3] sm:$0xff]
    %v97 = vadd.f32 %v84, %v85
    %v98 = vadd.f32 %v96, %v97
    %99 = vst [vmem:[#allocation3] sm:$0xff] %v98
    // Predicated region
    $region30: #{tpu_custom_call.1} parent=1 // pred_check
      %p100 = pneg %p74
    $region31: #{tpu_custom_call.1} parent=1 // pred_check_branch
      %102 = sbr.rel (%p100) target = $region33
    $region32: #{tpu_custom_call.1} parent=1 // pred_region
      %v103 = vld [vmem:[#allocation2] sm:$0xff]
      %104 = vadd.xlane.f32.xlu0 %v103
      %v105 = vpop.xlane.xlu0 %104
      %v106 = vrot.slane %v105, 4
      %v107 = vadd.f32 %v105, %v106
      %v108 = vrot.slane %v107, 2
      %v109 = vadd.f32 %v107, %v108
      %v110 = vrot.slane %v109, 1
      %v111 = vadd.f32 %v109, %v110
      %s112 = vtos %v111
      %s113 = scalar_lea.smem [#allocation10], 0
      %114 = sst [smem:[%s113]] %s112
      %v115 = vld [vmem:[#allocation3] sm:$0xff]
      %116 = vadd.xlane.f32.xlu0 %v115
      %v117 = vpop.xlane.xlu0 %116
      %v118 = vrot.slane %v117, 4
      %v119 = vadd.f32 %v117, %v118
      %v120 = vrot.slane %v119, 2
      %v121 = vadd.f32 %v119, %v120
      %v122 = vrot.slane %v121, 1
      %v123 = vadd.f32 %v121, %v122
      %s124 = vtos %v123
      %s125 = scalar_lea.smem [#allocation10], 1
      %126 = sst [smem:[%s125]] %s124
    $region33: #{tpu_custom_call.1} parent=1 // pred_fallthru
      _
    // Predicated region
    $region34: #{tpu_custom_call.1} parent=1 // pred_check
      _
    $region35: #{tpu_custom_call.1} parent=1 // pred_check_branch
      %128 = sbr.rel (0) target = $region37
    $region36: #{tpu_custom_call.1} parent=1 // pred_region
      %s130 = ssub.s32 16, 16
      %131 = vsyncadd [#allocation6], %s130
      %134 = dma.smem_to_hbm [#allocation10], 16, %s3, [#allocation6]
    $region37: #{tpu_custom_call.1} parent=1 // pred_fallthru
      _
    // Predicated region
    $region38: #{tpu_custom_call.1} parent=1 // pred_check
      _
    $region39: #{tpu_custom_call.1} parent=1 // pred_check_branch
      %136 = sbr.rel (0) target = $region41
    $region40: #{tpu_custom_call.1} parent=1 // pred_region
      %137 = dma.done [#allocation6], 16
    $region41: #{tpu_custom_call.1} parent=1 // pred_fallthru
      _
    %138 = sfence
    %139 = vsyncpa [#allocation5], 1
    %140 = vsyncpa [#allocation8], 1
    %141 = vsyncpa [#allocation6], 1

</llo_original>
